<compile_context>
chip_gen: v6e
topology: v6e:2x2x1
jax: 0.10.0
libtpu: 0.0.40
codegen_flags: <defaults>
</compile_context>

<pallas_src>
import math

import jax
import jax.numpy as jnp
from jax.experimental import pallas as pl
from jax.experimental.pallas import tpu as pltpu


def _cdiv(a, b):
    return -(-a // b)


def _round_up(x, m):
    return _cdiv(x, m) * m


def _policy_nn_kernel(
    x_ref,
    w1_ref, b1_ref,
    w2_ref, b2_ref,
    wh_ref, bh_ref,
    lo_ref, hi_ref,
    out_ref,
):
    # Layer 1: Linear + ReLU (f32 accumulation on the MXU).
    h1 = jnp.dot(x_ref[...], w1_ref[...],
                 preferred_element_type=jnp.float32) + b1_ref[...]
    h1 = jnp.maximum(h1, 0.0)

    # Layer 2: Linear + ReLU.  .astype(w.dtype) is a no-op in the f32 path and
    # keeps the matmul in bf16 when weights are bf16.
    h2 = jnp.dot(h1.astype(w2_ref.dtype), w2_ref[...],
                 preferred_element_type=jnp.float32) + b2_ref[...]
    h2 = jnp.maximum(h2, 0.0)

    # Fused, lane-padded heads: cols [0, n_out)=mean, [n_out, 2*n_out)=log_std,
    # remaining cols are zero padding (discarded by the wrapper).
    head = jnp.dot(h2.astype(wh_ref.dtype), wh_ref[...],
                   preferred_element_type=jnp.float32) + bh_ref[...]

    # Per-column clamp: lo/hi are +-inf for mean / padding columns, so only
    # the log_std columns are actually clipped.  Pure VPU min/max.
    out = jnp.minimum(jnp.maximum(head, lo_ref[...]), hi_ref[...])
    out_ref[...] = out.astype(out_ref.dtype)


def policy_nn_forward(x, params, logstd_range=(-20.0, 2.0),
                      batch_tile=2048, compute_dtype=jnp.float32):
    """PolicyNN forward pass via a batch-tiled Pallas kernel.

    x: [B, n_in] float32
    params: dict from init_policy_nn_params (fused head wh=[hidden, HEAD_N],
            bh=[1, HEAD_N] with HEAD_N a multiple of 128).
    Returns (mean, log_std), each [B, n_out] float32.
    """
    B, n_in = x.shape
    n_out = params["wm"].shape[1]
    head_n = params["wh"].shape[1]          # lane-padded, multiple of 128

    # ---- batch tiling -------------------------------------------------------
    # TB multiple of 8; ragged last tile handled by Pallas masking (no pad).
    steps = _cdiv(B, batch_tile)
    if steps == 1 and B >= 16:
        steps = 2          # v7x: keep >= 2 parallel steps for its 2 TensorCores
    TB = _round_up(_cdiv(B, steps), 8)
    grid = (_cdiv(B, TB),)

    # ---- dtype handling (no in-kernel casts) --------------------------------
    def _maybe_cast(a):
        return a if a.dtype == compute_dtype else a.astype(compute_dtype)

    x_c = _maybe_cast(x)
    w1 = _maybe_cast(params["w1"])
    w2 = _maybe_cast(params["w2"])
    wh = _maybe_cast(params["wh"])
    b1, b2, bh = params["b1"], params["b2"], params["bh"]   # stay f32 (post-acc)

    # Per-column clamp bounds for the fused head output.
    col = jnp.arange(head_n)
    is_logstd = (col >= n_out) & (col < 2 * n_out)
    lo = jnp.where(is_logstd, jnp.float32(logstd_range[0]),
                   -jnp.inf).astype(jnp.float32)[None, :]
    hi = jnp.where(is_logstd, jnp.float32(logstd_range[1]),
                   jnp.inf).astype(jnp.float32)[None, :]

    # ---- specs ---------------------------------------------------------------
    act_spec = pl.BlockSpec((TB, n_in), lambda i: (i, 0))
    out_spec = pl.BlockSpec((TB, head_n), lambda i: (i, 0))

    def resident(arr):
        # Full-array block, same index every grid step -> stays in VMEM.
        return pl.BlockSpec(arr.shape, lambda i: (0, 0))

    out = pl.pallas_call(
        _policy_nn_kernel,
        out_shape=jax.ShapeDtypeStruct((B, head_n), jnp.float32),
        grid=grid,
        in_specs=[
            act_spec,
            resident(w1), resident(b1),
            resident(w2), resident(b2),
            resident(wh), resident(bh),
            resident(lo), resident(hi),
        ],
        out_specs=out_spec,
        compiler_params=pltpu.CompilerParams(
            dimension_semantics=("parallel",),
        ),
    )(x_c, w1, b1, w2, b2, wh, bh, lo, hi)

    mean = out[:, :n_out]
    log_std = out[:, n_out:2 * n_out]
    return mean, log_std


def init_policy_nn_params(key, n_in, n_out, hidden=256,
                          param_dtype=jnp.float32):
    """Deterministic synthetic init mirroring PyTorch's shapes/ranges.

    nn.Linear default: uniform(-1/sqrt(fan_in), 1/sqrt(fan_in)) for W and b.
    mean / log_std heads: uniform(-0.003, 0.003).
    Weights are stored pre-transposed as (in, out).  The two heads are fused
    and zero-padded to a 128-lane-multiple (hidden, HEAD_N) matrix so the
    kernel's output slab is lane-dense.  Set param_dtype=jnp.bfloat16 to store
    the weights pre-cast for the bf16 MXU path (biases stay f32).
    """
    ks = jax.random.split(key, 8)

    def lin(kw, kb, fan_in, fan_out, bound):
        w = jax.random.uniform(kw, (fan_in, fan_out), jnp.float32, -bound, bound)
        b = jax.random.uniform(kb, (1, fan_out), jnp.float32, -bound, bound)
        return w, b

    w1, b1 = lin(ks[0], ks[1], n_in, hidden, 1.0 / math.sqrt(n_in))
    w2, b2 = lin(ks[2], ks[3], hidden, hidden, 1.0 / math.sqrt(hidden))
    wm, bm = lin(ks[4], ks[5], hidden, n_out, 0.003)
    ws, bs = lin(ks[6], ks[7], hidden, n_out, 0.003)

    # Fused mean|log_std head, zero-padded to a multiple of 128 output lanes.
    head_n = max(128, _round_up(2 * n_out, 128))
    wh = jnp.zeros((hidden, head_n), jnp.float32)
    wh = wh.at[:, :n_out].set(wm).at[:, n_out:2 * n_out].set(ws)
    bh = jnp.zeros((1, head_n), jnp.float32)
    bh = bh.at[:, :n_out].set(bm).at[:, n_out:2 * n_out].set(bs)

    return dict(
        w1=w1.astype(param_dtype), b1=b1,
        w2=w2.astype(param_dtype), b2=b2,
        wh=wh.astype(param_dtype), bh=bh,
        # unfused f32 copies kept only for the pure-JAX reference
        wm=wm, bm=bm, ws=ws, bs=bs,
    )


def policy_nn_reference(x, params, logstd_range=(-20.0, 2.0)):
    """Pure-JAX reference (unfused heads, f32) for correctness checking."""
    w1 = params["w1"].astype(jnp.float32)
    w2 = params["w2"].astype(jnp.float32)
    h1 = jax.nn.relu(x @ w1 + params["b1"])
    h2 = jax.nn.relu(h1 @ w2 + params["b2"])
    mean = h2 @ params["wm"] + params["bm"]
    log_std = jnp.clip(h2 @ params["ws"] + params["bs"], *logstd_range)
    return mean, log_std


if __name__ == "__main__":
    # Small shapes consistent with the module: batch=2 observations of dim 16,
    # hidden=32, action dim (n_out)=8.
    B, n_in, hidden, n_out = 2, 16, 32, 8

    key = jax.random.PRNGKey(0)
    kx, kp = jax.random.split(key)

    x = jax.random.normal(kx, (B, n_in), jnp.float32)
    params = init_policy_nn_params(kp, n_in, n_out, hidden)

    mean, log_std = policy_nn_forward(x, params)
    jax.block_until_ready((mean, log_std))

    mean_ref, log_std_ref = policy_nn_reference(x, params)
    assert mean.shape == (B, n_out) and log_std.shape == (B, n_out)
    assert jnp.allclose(mean, mean_ref, atol=1e-5, rtol=1e-5)
    assert jnp.allclose(log_std, log_std_ref, atol=1e-5, rtol=1e-5)
    assert bool(jnp.all(log_std >= -20.0)) and bool(jnp.all(log_std <= 2.0))

    print("KERNEL_OK")
</pallas_src>

<mosaic_0001>
module attributes {stable_mosaic.version = 11 : i64} {
  func.func @_policy_nn_kernel(%arg0: i32, %arg1: memref<8x16xf32, #tpu.memory_space<vmem>>, %arg2: memref<16x32xf32, #tpu.memory_space<vmem>>, %arg3: memref<1x32xf32, #tpu.memory_space<vmem>>, %arg4: memref<32x32xf32, #tpu.memory_space<vmem>>, %arg5: memref<1x32xf32, #tpu.memory_space<vmem>>, %arg6: memref<32x128xf32, #tpu.memory_space<vmem>>, %arg7: memref<1x128xf32, #tpu.memory_space<vmem>>, %arg8: memref<1x128xf32, #tpu.memory_space<vmem>>, %arg9: memref<1x128xf32, #tpu.memory_space<vmem>>, %arg10: memref<8x128xf32, #tpu.memory_space<vmem>>) attributes {dimension_semantics = [#tpu.dimension_semantics<parallel>], iteration_bounds = array<i64: 1>, scalar_prefetch = 0 : i64, scratch_operands = 0 : i64, tpu.core_type = #tpu.core_type<tc>, window_params = [{transform_indices = @transform_0, window_bounds = array<i64: 8, 16>}, {pipeline_mode = #tpu.pipeline_mode<synchronous>, transform_indices = @transform_1, window_bounds = array<i64: 16, 32>}, {pipeline_mode = #tpu.pipeline_mode<synchronous>, transform_indices = @transform_2, window_bounds = array<i64: 1, 32>}, {pipeline_mode = #tpu.pipeline_mode<synchronous>, transform_indices = @transform_3, window_bounds = array<i64: 32, 32>}, {pipeline_mode = #tpu.pipeline_mode<synchronous>, transform_indices = @transform_4, window_bounds = array<i64: 1, 32>}, {pipeline_mode = #tpu.pipeline_mode<synchronous>, transform_indices = @transform_5, window_bounds = array<i64: 32, 128>}, {pipeline_mode = #tpu.pipeline_mode<synchronous>, transform_indices = @transform_6, window_bounds = array<i64: 1, 128>}, {pipeline_mode = #tpu.pipeline_mode<synchronous>, transform_indices = @transform_7, window_bounds = array<i64: 1, 128>}, {pipeline_mode = #tpu.pipeline_mode<synchronous>, transform_indices = @transform_8, window_bounds = array<i64: 1, 128>}, {transform_indices = @transform_9, window_bounds = array<i64: 8, 128>}]} {
    %c0 = arith.constant 0 : index
    %c0_0 = arith.constant 0 : index
    %0 = vector.load %arg1[%c0, %c0_0] : memref<8x16xf32, #tpu.memory_space<vmem>>, vector<8x16xf32>
    %c0_1 = arith.constant 0 : index
    %c0_2 = arith.constant 0 : index
    %1 = vector.load %arg2[%c0_1, %c0_2] : memref<16x32xf32, #tpu.memory_space<vmem>>, vector<16x32xf32>
    %cst = arith.constant dense<0.000000e+00> : vector<8x32xf32>
    %2 = tpu.matmul %0, %1, %cst {dimension_numbers = #tpu.dot_dimension_numbers<[1], [0], [0], [1], [0, 0, 1, 1], [], []>} : vector<8x16xf32>, vector<16x32xf32>, vector<8x32xf32> -> vector<8x32xf32>
    %c0_3 = arith.constant 0 : index
    %c0_4 = arith.constant 0 : index
    %3 = vector.load %arg3[%c0_3, %c0_4] : memref<1x32xf32, #tpu.memory_space<vmem>>, vector<1x32xf32>
    %4 = vector.broadcast %3 : vector<1x32xf32> to vector<8x32xf32>
    %5 = arith.addf %2, %4 : vector<8x32xf32>
    %cst_5 = arith.constant 0.000000e+00 : f32
    %6 = vector.broadcast %cst_5 : f32 to vector<8x32xf32>
    %7 = arith.maximumf %5, %6 : vector<8x32xf32>
    %c0_6 = arith.constant 0 : index
    %c0_7 = arith.constant 0 : index
    %8 = vector.load %arg4[%c0_6, %c0_7] : memref<32x32xf32, #tpu.memory_space<vmem>>, vector<32x32xf32>
    %cst_8 = arith.constant dense<0.000000e+00> : vector<8x32xf32>
    %9 = tpu.matmul %7, %8, %cst_8 {dimension_numbers = #tpu.dot_dimension_numbers<[1], [0], [0], [1], [0, 0, 1, 1], [], []>} : vector<8x32xf32>, vector<32x32xf32>, vector<8x32xf32> -> vector<8x32xf32>
    %c0_9 = arith.constant 0 : index
    %c0_10 = arith.constant 0 : index
    %10 = vector.load %arg5[%c0_9, %c0_10] : memref<1x32xf32, #tpu.memory_space<vmem>>, vector<1x32xf32>
    %11 = vector.broadcast %10 : vector<1x32xf32> to vector<8x32xf32>
    %12 = arith.addf %9, %11 : vector<8x32xf32>
    %cst_11 = arith.constant 0.000000e+00 : f32
    %13 = vector.broadcast %cst_11 : f32 to vector<8x32xf32>
    %14 = arith.maximumf %12, %13 : vector<8x32xf32>
    %c0_12 = arith.constant 0 : index
    %c0_13 = arith.constant 0 : index
    %15 = vector.load %arg6[%c0_12, %c0_13] : memref<32x128xf32, #tpu.memory_space<vmem>>, vector<32x128xf32>
    %cst_14 = arith.constant dense<0.000000e+00> : vector<8x128xf32>
    %16 = tpu.matmul %14, %15, %cst_14 {dimension_numbers = #tpu.dot_dimension_numbers<[1], [0], [0], [1], [0, 0, 1, 1], [], []>} : vector<8x32xf32>, vector<32x128xf32>, vector<8x128xf32> -> vector<8x128xf32>
    %c0_15 = arith.constant 0 : index
    %c0_16 = arith.constant 0 : index
    %17 = vector.load %arg7[%c0_15, %c0_16] : memref<1x128xf32, #tpu.memory_space<vmem>>, vector<1x128xf32>
    %18 = vector.broadcast %17 : vector<1x128xf32> to vector<8x128xf32>
    %19 = arith.addf %16, %18 : vector<8x128xf32>
    %c0_17 = arith.constant 0 : index
    %c0_18 = arith.constant 0 : index
    %20 = vector.load %arg8[%c0_17, %c0_18] : memref<1x128xf32, #tpu.memory_space<vmem>>, vector<1x128xf32>
    %21 = vector.broadcast %20 : vector<1x128xf32> to vector<8x128xf32>
    %22 = arith.maximumf %19, %21 : vector<8x128xf32>
    %c0_19 = arith.constant 0 : index
    %c0_20 = arith.constant 0 : index
    %23 = vector.load %arg9[%c0_19, %c0_20] : memref<1x128xf32, #tpu.memory_space<vmem>>, vector<1x128xf32>
    %24 = vector.broadcast %23 : vector<1x128xf32> to vector<8x128xf32>
    %25 = arith.minimumf %22, %24 : vector<8x128xf32>
    %c0_21 = arith.constant 0 : index
    %c0_22 = arith.constant 0 : index
    %26 = vector.load %arg10[%c0_21, %c0_22] : memref<8x128xf32, #tpu.memory_space<vmem>>, vector<8x128xf32>
    tpu.vector_store %arg10[%c0_21, %c0_22], %25 {strides = array<i32>} : memref<8x128xf32, #tpu.memory_space<vmem>>, vector<8x128xf32>,
    return
  }
  func.func @transform_0(%arg0: i32) -> (i32, i32) {
    %c0_i32 = arith.constant 0 : i32
    %c0_i32_0 = arith.constant 0 : i32
    return %arg0, %c0_i32 : i32, i32
  }
  func.func @transform_1(%arg0: i32) -> (i32, i32) {
    %c0_i32 = arith.constant 0 : i32
    %c0_i32_0 = arith.constant 0 : i32
    %c0_i32_1 = arith.constant 0 : i32
    return %c0_i32, %c0_i32_0 : i32, i32
  }
  func.func @transform_2(%arg0: i32) -> (i32, i32) {
    %c0_i32 = arith.constant 0 : i32
    %c0_i32_0 = arith.constant 0 : i32
    %c0_i32_1 = arith.constant 0 : i32
    return %c0_i32, %c0_i32_0 : i32, i32
  }
  func.func @transform_3(%arg0: i32) -> (i32, i32) {
    %c0_i32 = arith.constant 0 : i32
    %c0_i32_0 = arith.constant 0 : i32
    %c0_i32_1 = arith.constant 0 : i32
    return %c0_i32, %c0_i32_0 : i32, i32
  }
  func.func @transform_4(%arg0: i32) -> (i32, i32) {
    %c0_i32 = arith.constant 0 : i32
    %c0_i32_0 = arith.constant 0 : i32
    %c0_i32_1 = arith.constant 0 : i32
    return %c0_i32, %c0_i32_0 : i32, i32
  }
  func.func @transform_5(%arg0: i32) -> (i32, i32) {
    %c0_i32 = arith.constant 0 : i32
    %c0_i32_0 = arith.constant 0 : i32
    %c0_i32_1 = arith.constant 0 : i32
    return %c0_i32, %c0_i32_0 : i32, i32
  }
  func.func @transform_6(%arg0: i32) -> (i32, i32) {
    %c0_i32 = arith.constant 0 : i32
    %c0_i32_0 = arith.constant 0 : i32
    %c0_i32_1 = arith.constant 0 : i32
    return %c0_i32, %c0_i32_0 : i32, i32
  }
  func.func @transform_7(%arg0: i32) -> (i32, i32) {
    %c0_i32 = arith.constant 0 : i32
    %c0_i32_0 = arith.constant 0 : i32
    %c0_i32_1 = arith.constant 0 : i32
    return %c0_i32, %c0_i32_0 : i32, i32
  }
  func.func @transform_8(%arg0: i32) -> (i32, i32) {
    %c0_i32 = arith.constant 0 : i32
    %c0_i32_0 = arith.constant 0 : i32
    %c0_i32_1 = arith.constant 0 : i32
    return %c0_i32, %c0_i32_0 : i32, i32
  }
  func.func @transform_9(%arg0: i32) -> (i32, i32) {
    %c0_i32 = arith.constant 0 : i32
    %c0_i32_0 = arith.constant 0 : i32
    return %arg0, %c0_i32 : i32, i32
  }
}

</mosaic_0001>

<llo_original>
// kernel: tpu_custom_call.1
$region0: #{tpu_custom_call.1}
  #allocation0 [shape = 'u32[]', space=smem, size = 0x4, offset = 0x4, fixed_abs, tag = 'smem constant byte address 0x4 - core index']
  #allocation1 [shape = 'u32[144,128]{1,0:T(1,128)}', space=vmem, size = 0x12000, scoped, tag = 'internal scratch']
  %s0 = inlined_call_operand.hbm [shape: f32[2,16], index: 0, kind: input, shape index: {}]
  %s1 = inlined_call_operand.hbm [shape: f32[16,32], index: 1, kind: input, shape index: {}]
  %s2 = inlined_call_operand.vmem [shape: f32[1,32], index: 2, kind: input, shape index: {}]
  %s3 = inlined_call_operand.hbm [shape: f32[32,32], index: 3, kind: input, shape index: {}]
  %s4 = inlined_call_operand.vmem [shape: f32[1,32], index: 4, kind: input, shape index: {}]
  %s5 = inlined_call_operand.hbm [shape: f32[32,128], index: 5, kind: input, shape index: {}]
  %s6 = inlined_call_operand.vmem [shape: f32[1,128], index: 6, kind: input, shape index: {}]
  %s7 = inlined_call_operand.vmem [shape: f32[1,128], index: 7, kind: input, shape index: {}]
  %s8 = inlined_call_operand.vmem [shape: f32[1,128], index: 8, kind: input, shape index: {}]
  %s9 = inlined_call_operand.hbm [shape: f32[2,128], index: 9, kind: output, shape index: {}]
  %s10 = sld [smem:[#allocation0]]
  $region62: #{tpu_custom_call.1} parent=0
    _
  %s12 = ssub.s32 1, %s10
  %s13 = scalar_select 0, %s12, %s10
  $region1: #{tpu_custom_call.1} parent=0
    #allocation2 [shape = 'u8[4096]{0}', space=vmem, size = 0x1000, scoped, tag = 'input window, operand 0, single buffered']
    #allocation3 [shape = 's32[1]{0}', space=sflag, size = 0x4, scoped, tag = 'scoped memory for tpu_custom_call.1']
    #allocation4 [shape = 's32[1]{0}', space=sflag, size = 0x4, scoped, tag = 'scoped memory for tpu_custom_call.1']
    #allocation5 [shape = 'u8[8192]{0}', space=vmem, size = 0x2000, scoped, tag = 'input window, operand 1, single buffered']
    #allocation6 [shape = 's32[1]{0}', space=sflag, size = 0x4, scoped, tag = 'scoped memory for tpu_custom_call.1']
    #allocation7 [shape = 'u8[16384]{0}', space=vmem, size = 0x4000, scoped, tag = 'input window, operand 3, single buffered']
    #allocation8 [shape = 'u8[16384]{0}', space=vmem, size = 0x4000, scoped, tag = 'input window, operand 5, single buffered']
    #allocation9 [shape = 's32[1]{0}', space=sflag, size = 0x4, scoped, tag = 'scoped memory for tpu_custom_call.1']
    #allocation10 [shape = 'u8[4096]{0}', space=vmem, size = 0x1000, scoped, tag = 'output window, operand 0, single buffered']
    %14 = vsyncpa [#allocation3], 0
    %15 = vsyncpa [#allocation6], 0
    %16 = vsyncpa [#allocation9], 0
    %17 = vsyncpa [#allocation4], 0
    // Predicated region
    $region2: #{tpu_custom_call.1} parent=1 // pred_check
      _
    $region3: #{tpu_custom_call.1} parent=1 // pred_check_branch
      %19 = sbr.rel (0) target = $region5
    $region4: #{tpu_custom_call.1} parent=1 // pred_region
      %s21 = ssub.s32 128, 32
      %22 = vsyncadd [#allocation3], %s21
      %s23 = sshll.u32 [#allocation2], 4
      %s24 = int_to_ptr.vmem [resolvable:$true] %s23
      %29 = dma.hbm_to_vmem [thread:$0]  %s0, 32, %s24, [#allocation3], 32, 32, 2
    $region5: #{tpu_custom_call.1} parent=1 // pred_fallthru
      _
    // Predicated region
    $region6: #{tpu_custom_call.1} parent=1 // pred_check
      _
    $region7: #{tpu_custom_call.1} parent=1 // pred_check_branch
      %31 = sbr.rel (0) target = $region9
    $region8: #{tpu_custom_call.1} parent=1 // pred_region
      %s33 = ssub.s32 256, 256
      %34 = vsyncadd [#allocation6], %s33
      %s35 = sshll.u32 [#allocation5], 4
      %s36 = int_to_ptr.vmem [resolvable:$true] %s35
      %41 = dma.hbm_to_vmem [thread:$0]  %s1, 256, %s36, [#allocation6], 128, 128, 8
    $region9: #{tpu_custom_call.1} parent=1 // pred_fallthru
      _
    // Predicated region
    $region10: #{tpu_custom_call.1} parent=1 // pred_check
      _
    $region11: #{tpu_custom_call.1} parent=1 // pred_check_branch
      %43 = sbr.rel (0) target = $region13
    $region12: #{tpu_custom_call.1} parent=1 // pred_region
      _
    $region13: #{tpu_custom_call.1} parent=1 // pred_fallthru
      _
    // Predicated region
    $region14: #{tpu_custom_call.1} parent=1 // pred_check
      _
    $region15: #{tpu_custom_call.1} parent=1 // pred_check_branch
      %45 = sbr.rel (0) target = $region17
    $region16: #{tpu_custom_call.1} parent=1 // pred_region
      %s47 = ssub.s32 512, 512
      %48 = vsyncadd [#allocation6], %s47
      %s49 = sshll.u32 [#allocation7], 4
      %s50 = int_to_ptr.vmem [resolvable:$true] %s49
      %55 = dma.hbm_to_vmem [thread:$0]  %s3, 512, %s50, [#allocation6], 128, 128, 8
    $region17: #{tpu_custom_call.1} parent=1 // pred_fallthru
      _
    // Predicated region
    $region18: #{tpu_custom_call.1} parent=1 // pred_check
      _
    $region19: #{tpu_custom_call.1} parent=1 // pred_check_branch
      %57 = sbr.rel (0) target = $region21
    $region20: #{tpu_custom_call.1} parent=1 // pred_region
      _
    $region21: #{tpu_custom_call.1} parent=1 // pred_fallthru
      _
    // Predicated region
    $region22: #{tpu_custom_call.1} parent=1 // pred_check
      _
    $region23: #{tpu_custom_call.1} parent=1 // pred_check_branch
      %59 = sbr.rel (0) target = $region25
    $region24: #{tpu_custom_call.1} parent=1 // pred_region
      %s61 = ssub.s32 512, 512
      %62 = vsyncadd [#allocation9], %s61
      %s63 = sshll.u32 [#allocation8], 4
      %s64 = int_to_ptr.vmem [resolvable:$true] %s63
      %69 = dma.hbm_to_vmem [thread:$0]  %s5, 512, %s64, [#allocation9], 128, 128, 8
    $region25: #{tpu_custom_call.1} parent=1 // pred_fallthru
      _
    // Predicated region
    $region26: #{tpu_custom_call.1} parent=1 // pred_check
      _
    $region27: #{tpu_custom_call.1} parent=1 // pred_check_branch
      %71 = sbr.rel (0) target = $region29
    $region28: #{tpu_custom_call.1} parent=1 // pred_region
      _
    $region29: #{tpu_custom_call.1} parent=1 // pred_fallthru
      _
    // Predicated region
    $region30: #{tpu_custom_call.1} parent=1 // pred_check
      _
    $region31: #{tpu_custom_call.1} parent=1 // pred_check_branch
      %73 = sbr.rel (0) target = $region33
    $region32: #{tpu_custom_call.1} parent=1 // pred_region
      _
    $region33: #{tpu_custom_call.1} parent=1 // pred_fallthru
      _
    // Predicated region
    $region34: #{tpu_custom_call.1} parent=1 // pred_check
      _
    $region35: #{tpu_custom_call.1} parent=1 // pred_check_branch
      %75 = sbr.rel (0) target = $region37
    $region36: #{tpu_custom_call.1} parent=1 // pred_region
      _
    $region37: #{tpu_custom_call.1} parent=1 // pred_fallthru
      _
    // Predicated region
    $region38: #{tpu_custom_call.1} parent=1 // pred_check
      _
    $region39: #{tpu_custom_call.1} parent=1 // pred_check_branch
      %77 = sbr.rel (0) target = $region41
    $region40: #{tpu_custom_call.1} parent=1 // pred_region
      %78 = dma.done [#allocation3], 128
    $region41: #{tpu_custom_call.1} parent=1 // pred_fallthru
      _
    // Predicated region
    $region42: #{tpu_custom_call.1} parent=1 // pred_check
      _
    $region43: #{tpu_custom_call.1} parent=1 // pred_check_branch
      %80 = sbr.rel (0) target = $region45
    $region44: #{tpu_custom_call.1} parent=1 // pred_region
      %81 = dma.done [#allocation6], 256
    $region45: #{tpu_custom_call.1} parent=1 // pred_fallthru
      _
    // Predicated region
    $region46: #{tpu_custom_call.1} parent=1 // pred_check
      _
    $region47: #{tpu_custom_call.1} parent=1 // pred_check_branch
      %83 = sbr.rel (0) target = $region49
    $region48: #{tpu_custom_call.1} parent=1 // pred_region
      %84 = dma.done [#allocation6], 512
    $region49: #{tpu_custom_call.1} parent=1 // pred_fallthru
      _
    // Predicated region
    $region50: #{tpu_custom_call.1} parent=1 // pred_check
      _
    $region51: #{tpu_custom_call.1} parent=1 // pred_check_branch
      %86 = sbr.rel (0) target = $region53
    $region52: #{tpu_custom_call.1} parent=1 // pred_region
      %87 = dma.done [#allocation9], 512
    $region53: #{tpu_custom_call.1} parent=1 // pred_fallthru
      _
    %v88 = vld [vmem:[#allocation2] sm:$0xff]
    %v89 = vld [vmem:[#allocation5] sm:$0xff]
    %v90 = vld [vmem:[#allocation5 + $0x8] sm:$0xff]
    %v91 = vld [vmem:[%s2] sm:$0x1]
    %v93 = vlaneseq
    %v94 = vshrl.u32 %v93, 7
    %v95 = vsub.s32 0, %v94
    %v96 = vrot.slane %v91, %v95
    %vm98 = vcmask 130048
    %v100 = vsel %vm98, %v88, 0
    %102 = vmatprep.subr.mxu0 0.0
    %103 = vmatpush1.msra.mxu0 0.0
    %104 = vmatprep.subr.mxu0 0.0
    %105 = vmatpush1.msra.mxu0 0.0
    %106 = vmatprep.subr.mxu0 0.0
    %107 = vmatpush1.msra.mxu0 0.0
    %108 = vmatprep.subr.mxu0 0.0
    %109 = vmatpush1.msra.mxu0 0.0
    %110 = vmatprep.subr.mxu0 0.0
    %111 = vmatpush1.msra.mxu0 0.0
    %112 = vmatprep.subr.mxu0 0.0
    %113 = vmatpush1.msra.mxu0 0.0
    %114 = vmatprep.subr.mxu0 0.0
    %115 = vmatpush1.msra.mxu0 0.0
    %116 = vmatprep.subr.mxu0 0.0
    %117 = vmatpush1.msra.mxu0 0.0
    %118 = vmatprep.subr.mxu0 0.0
    %119 = vmatpush1.msra.mxu0 0.0
    %120 = vmatprep.subr.mxu0 0.0
    %121 = vmatpush1.msra.mxu0 0.0
    %122 = vmatprep.subr.mxu0 0.0
    %123 = vmatpush1.msra.mxu0 0.0
    %124 = vmatprep.subr.mxu0 0.0
    %125 = vmatpush1.msra.mxu0 0.0
    %126 = vmatprep.subr.mxu0 0.0
    %127 = vmatpush1.msra.mxu0 0.0
    %128 = vmatprep.subr.mxu0 0.0
    %129 = vmatpush1.msra.mxu0 0.0
    %130 = vmatprep.subr.mxu0 0.0
    %131 = vmatpush1.msra.mxu0 %v90
    %132 = vmatprep.subr.mxu0 0.0
    %133 = vmatpush1.msra.mxu0 %v89
    %134 = vmatprep.subr.mxu0 0.0
    %135 = vmatpush2.msra.mxu0 0.0
    %136 = vmatprep.subr.mxu0 0.0
    %137 = vmatpush2.msra.mxu0 0.0
    %138 = vmatprep.subr.mxu0 0.0
    %139 = vmatpush2.msra.mxu0 0.0
    %140 = vmatprep.subr.mxu0 0.0
    %141 = vmatpush2.msra.mxu0 0.0
    %142 = vmatprep.subr.mxu0 0.0
    %143 = vmatpush2.msra.mxu0 0.0
    %144 = vmatprep.subr.mxu0 0.0
    %145 = vmatpush2.msra.mxu0 0.0
    %146 = vmatprep.subr.mxu0 0.0
    %147 = vmatpush2.msra.mxu0 0.0
    %148 = vmatprep.subr.mxu0 0.0
    %149 = vmatpush2.msra.mxu0 0.0
    %150 = vmatprep.subr.mxu0 0.0
    %151 = vmatpush2.msra.mxu0 0.0
    %152 = vmatprep.subr.mxu0 0.0
    %153 = vmatpush2.msra.mxu0 0.0
    %154 = vmatprep.subr.mxu0 0.0
    %155 = vmatpush2.msra.mxu0 0.0
    %156 = vmatprep.subr.mxu0 0.0
    %157 = vmatpush2.msra.mxu0 0.0
    %158 = vmatprep.subr.mxu0 0.0
    %159 = vmatpush2.msra.mxu0 0.0
    %160 = vmatprep.subr.mxu0 0.0
    %161 = vmatpush2.msra.mxu0 0.0
    %162 = vmatprep.subr.mxu0 0.0
    %163 = vmatpush2.msra.mxu0 0.0
    %164 = vmatprep.subr.mxu0 0.0
    %165 = vmatpush2.msra.mxu0 0.0
    %166 = vmatprep.mubr.f32.mxu0 0.0
    %167 = vmatmul.mubr.f32.gmra.mxu0 %v100
    %v168 = vpop.f32.mrf.mxu0
    %v169 = vadd.f32 %v96, %v168
    %v170 = vpop.f32.mrf.mxu0
    %171 = vdwg.mxu0
    %v172 = vmax.f32 %v169, 0.0
    %v173 = vld [vmem:[#allocation7] sm:$0xff]
    %v174 = vld [vmem:[#allocation7 + $0x8] sm:$0xff]
    %v175 = vld [vmem:[#allocation7 + $0x10] sm:$0xff]
    %v176 = vld [vmem:[#allocation7 + $0x18] sm:$0xff]
    %v177 = vld [vmem:[%s4] sm:$0x1]
    %v179 = vlaneseq
    %v180 = vshrl.u32 %v179, 7
    %v181 = vsub.s32 0, %v180
    %v182 = vrot.slane %v177, %v181
    %vm184 = vcmask 261120
    %v186 = vsel %vm184, %v172, 0
    %188 = vmatprep.subr.mxu0 0.0
    %189 = vmatpush1.msra.mxu0 0.0
    %190 = vmatprep.subr.mxu0 0.0
    %191 = vmatpush1.msra.mxu0 0.0
    %192 = vmatprep.subr.mxu0 0.0
    %193 = vmatpush1.msra.mxu0 0.0
    %194 = vmatprep.subr.mxu0 0.0
    %195 = vmatpush1.msra.mxu0 0.0
    %196 = vmatprep.subr.mxu0 0.0
    %197 = vmatpush1.msra.mxu0 0.0
    %198 = vmatprep.subr.mxu0 0.0
    %199 = vmatpush1.msra.mxu0 0.0
    %200 = vmatprep.subr.mxu0 0.0
    %201 = vmatpush1.msra.mxu0 0.0
    %202 = vmatprep.subr.mxu0 0.0
    %203 = vmatpush1.msra.mxu0 0.0
    %204 = vmatprep.subr.mxu0 0.0
    %205 = vmatpush1.msra.mxu0 0.0
    %206 = vmatprep.subr.mxu0 0.0
    %207 = vmatpush1.msra.mxu0 0.0
    %208 = vmatprep.subr.mxu0 0.0
    %209 = vmatpush1.msra.mxu0 0.0
    %210 = vmatprep.subr.mxu0 0.0
    %211 = vmatpush1.msra.mxu0 0.0
    %212 = vmatprep.subr.mxu0 0.0
    %213 = vmatpush1.msra.mxu0 %v176
    %214 = vmatprep.subr.mxu0 0.0
    %215 = vmatpush1.msra.mxu0 %v175
    %216 = vmatprep.subr.mxu0 0.0
    %217 = vmatpush1.msra.mxu0 %v174
    %218 = vmatprep.subr.mxu0 0.0
    %219 = vmatpush1.msra.mxu0 %v173
    %220 = vmatprep.subr.mxu0 0.0
    %221 = vmatpush2.msra.mxu0 0.0
    %222 = vmatprep.subr.mxu0 0.0
    %223 = vmatpush2.msra.mxu0 0.0
    %224 = vmatprep.subr.mxu0 0.0
    %225 = vmatpush2.msra.mxu0 0.0
    %226 = vmatprep.subr.mxu0 0.0
    %227 = vmatpush2.msra.mxu0 0.0
    %228 = vmatprep.subr.mxu0 0.0
    %229 = vmatpush2.msra.mxu0 0.0
    %230 = vmatprep.subr.mxu0 0.0
    %231 = vmatpush2.msra.mxu0 0.0
    %232 = vmatprep.subr.mxu0 0.0
    %233 = vmatpush2.msra.mxu0 0.0
    %234 = vmatprep.subr.mxu0 0.0
    %235 = vmatpush2.msra.mxu0 0.0
    %236 = vmatprep.subr.mxu0 0.0
    %237 = vmatpush2.msra.mxu0 0.0
    %238 = vmatprep.subr.mxu0 0.0
    %239 = vmatpush2.msra.mxu0 0.0
    %240 = vmatprep.subr.mxu0 0.0
    %241 = vmatpush2.msra.mxu0 0.0
    %242 = vmatprep.subr.mxu0 0.0
    %243 = vmatpush2.msra.mxu0 0.0
    %244 = vmatprep.subr.mxu0 0.0
    %245 = vmatpush2.msra.mxu0 0.0
    %246 = vmatprep.subr.mxu0 0.0
    %247 = vmatpush2.msra.mxu0 0.0
    %248 = vmatprep.subr.mxu0 0.0
    %249 = vmatpush2.msra.mxu0 0.0
    %250 = vmatprep.subr.mxu0 0.0
    %251 = vmatpush2.msra.mxu0 0.0
    %252 = vmatprep.mubr.f32.mxu0 0.0
    %253 = vmatmul.mubr.f32.gmra.mxu0 %v186
    %v254 = vpop.f32.mrf.mxu0
    %v255 = vadd.f32 %v182, %v254
    %v256 = vpop.f32.mrf.mxu0
    %257 = vdwg.mxu0
    %v258 = vmax.f32 %v255, 0.0
    %v259 = vld [vmem:[#allocation8] sm:$0xff]
    %v260 = vld [vmem:[#allocation8 + $0x8] sm:$0xff]
    %v261 = vld [vmem:[#allocation8 + $0x10] sm:$0xff]
    %v262 = vld [vmem:[#allocation8 + $0x18] sm:$0xff]
    %v263 = vld [vmem:[%s6] sm:$0x1]
    %v265 = vlaneseq
    %v266 = vshrl.u32 %v265, 7
    %v267 = vsub.s32 0, %v266
    %v268 = vrot.slane %v263, %v267
    %v271 = vsel %vm184, %v258, 0
    %273 = vmatprep.subr.mxu0 0.0
    %274 = vmatpush1.msra.mxu0 0.0
    %275 = vmatprep.subr.mxu0 0.0
    %276 = vmatpush1.msra.mxu0 0.0
    %277 = vmatprep.subr.mxu0 0.0
    %278 = vmatpush1.msra.mxu0 0.0
    %279 = vmatprep.subr.mxu0 0.0
    %280 = vmatpush1.msra.mxu0 0.0
    %281 = vmatprep.subr.mxu0 0.0
    %282 = vmatpush1.msra.mxu0 0.0
    %283 = vmatprep.subr.mxu0 0.0
    %284 = vmatpush1.msra.mxu0 0.0
    %285 = vmatprep.subr.mxu0 0.0
    %286 = vmatpush1.msra.mxu0 0.0
    %287 = vmatprep.subr.mxu0 0.0
    %288 = vmatpush1.msra.mxu0 0.0
    %289 = vmatprep.subr.mxu0 0.0
    %290 = vmatpush1.msra.mxu0 0.0
    %291 = vmatprep.subr.mxu0 0.0
    %292 = vmatpush1.msra.mxu0 0.0
    %293 = vmatprep.subr.mxu0 0.0
    %294 = vmatpush1.msra.mxu0 0.0
    %295 = vmatprep.subr.mxu0 0.0
    %296 = vmatpush1.msra.mxu0 0.0
    %297 = vmatprep.subr.mxu0 0.0
    %298 = vmatpush1.msra.mxu0 %v262
    %299 = vmatprep.subr.mxu0 0.0
    %300 = vmatpush1.msra.mxu0 %v261
    %301 = vmatprep.subr.mxu0 0.0
    %302 = vmatpush1.msra.mxu0 %v260
    %303 = vmatprep.subr.mxu0 0.0
    %304 = vmatpush1.msra.mxu0 %v259
    %305 = vmatprep.subr.mxu0 0.0
    %306 = vmatpush2.msra.mxu0 0.0
    %307 = vmatprep.subr.mxu0 0.0
    %308 = vmatpush2.msra.mxu0 0.0
    %309 = vmatprep.subr.mxu0 0.0
    %310 = vmatpush2.msra.mxu0 0.0
    %311 = vmatprep.subr.mxu0 0.0
    %312 = vmatpush2.msra.mxu0 0.0
    %313 = vmatprep.subr.mxu0 0.0
    %314 = vmatpush2.msra.mxu0 0.0
    %315 = vmatprep.subr.mxu0 0.0
    %316 = vmatpush2.msra.mxu0 0.0
    %317 = vmatprep.subr.mxu0 0.0
    %318 = vmatpush2.msra.mxu0 0.0
    %319 = vmatprep.subr.mxu0 0.0
    %320 = vmatpush2.msra.mxu0 0.0
    %321 = vmatprep.subr.mxu0 0.0
    %322 = vmatpush2.msra.mxu0 0.0
    %323 = vmatprep.subr.mxu0 0.0
    %324 = vmatpush2.msra.mxu0 0.0
    %325 = vmatprep.subr.mxu0 0.0
    %326 = vmatpush2.msra.mxu0 0.0
    %327 = vmatprep.subr.mxu0 0.0
    %328 = vmatpush2.msra.mxu0 0.0
    %329 = vmatprep.subr.mxu0 0.0
    %330 = vmatpush2.msra.mxu0 0.0
    %331 = vmatprep.subr.mxu0 0.0
    %332 = vmatpush2.msra.mxu0 0.0
    %333 = vmatprep.subr.mxu0 0.0
    %334 = vmatpush2.msra.mxu0 0.0
    %335 = vmatprep.subr.mxu0 0.0
    %336 = vmatpush2.msra.mxu0 0.0
    %337 = vmatprep.mubr.f32.mxu0 0.0
    %338 = vmatmul.mubr.f32.gmra.mxu0 %v271
    %v339 = vpop.f32.mrf.mxu0
    %v340 = vadd.f32 %v268, %v339
    %v341 = vpop.f32.mrf.mxu0
    %342 = vdwg.mxu0
    %v343 = vld [vmem:[%s7] sm:$0x1]
    %v345 = vlaneseq
    %v346 = vshrl.u32 %v345, 7
    %v347 = vsub.s32 0, %v346
    %v348 = vrot.slane %v343, %v347
    %v350 = vmax.f32 %v340, %v348
    %v351 = vld [vmem:[%s8] sm:$0x1]
    %v353 = vlaneseq
    %v354 = vshrl.u32 %v353, 7
    %v355 = vsub.s32 0, %v354
    %v356 = vrot.slane %v351, %v355
    %v358 = vmin.f32 %v350, %v356
    %359 = vst [vmem:[#allocation10] sm:$0xff] %v358
    // Predicated region
    $region54: #{tpu_custom_call.1} parent=1 // pred_check
      _
    $region55: #{tpu_custom_call.1} parent=1 // pred_check_branch
      %361 = sbr.rel (0) target = $region57
    $region56: #{tpu_custom_call.1} parent=1 // pred_region
      %s363 = ssub.s32 128, 32
      %364 = vsyncadd [#allocation4], %s363
      %s365 = sshll.u32 [#allocation10], 4
      %s366 = int_to_ptr.vmem [resolvable:$true] %s365
      %371 = dma.vmem_to_hbm [thread:$0]  %s366, 32, %s9, [#allocation4], 32, 32, 2
    $region57: #{tpu_custom_call.1} parent=1 // pred_fallthru
      _
    // Predicated region
    $region58: #{tpu_custom_call.1} parent=1 // pred_check
      _
    $region59: #{tpu_custom_call.1} parent=1 // pred_check_branch
      %373 = sbr.rel (0) target = $region61
    $region60: #{tpu_custom_call.1} parent=1 // pred_region
      %374 = dma.done [#allocation4], 128
    $region61: #{tpu_custom_call.1} parent=1 // pred_fallthru
      _
    %375 = vsyncpa [#allocation3], 1
    %376 = vsyncpa [#allocation6], 1
    %377 = vsyncpa [#allocation9], 1
    %378 = vsyncpa [#allocation4], 1

</llo_original>
